<compile_context>
chip_gen: v5e
topology: v5e:2x2
jax: 0.10.0
libtpu: 0.0.40
codegen_flags: <defaults>
</compile_context>

<pallas_src>
import functools

import jax
import jax.numpy as jnp
from jax import lax
from jax.experimental import pallas as pl
from jax.experimental.pallas import tpu as pltpu

NEG_SLOPE = 0.05  # LeakyReLU negative slope of the PyTorch module


def _rup8(n: int) -> int:
    return ((n + 7) // 8) * 8


# ----------------------------------------------------------------------------------
# One-time probe: pin pltpu.roll's rotation direction against jnp.roll so the conv
# tap indexing below can never silently flip (the measured sign is used statically).
# ----------------------------------------------------------------------------------
@functools.lru_cache(maxsize=None)
def _roll_matches_jnp() -> bool:
    def probe(x_ref, o_ref):
        o_ref[...] = pltpu.roll(x_ref[...], 3, axis=1)

    x = jnp.arange(8 * 128, dtype=jnp.float32).reshape(8, 128)
    y = pl.pallas_call(probe, out_shape=jax.ShapeDtypeStruct((8, 128), jnp.float32))(x)
    return bool(jnp.array_equal(y, jnp.roll(x, 3, axis=1)))


# ----------------------------------------------------------------------------------
# In-kernel helpers (operate on lane-dense (C8, hw) values)
# ----------------------------------------------------------------------------------
def _shift_flat(x, s, hw, roll_sign):
    """out[:, i] = x[:, i + s] up to circular wrap (caller masks wrapped lanes)."""
    amt = ((-s) if roll_sign else s) % hw
    if amt == 0:
        return x
    return pltpu.roll(x, amt, axis=1)


def _pad1_shifts_masks(W, hw):
    """Tap shifts + boundary masks for a 3x3 / stride-1 / pad-1 conv on a flat grid.

    Returns (shifts, masks); masks[i] is None for the centre tap, else a (1, hw)
    boolean validity mask.  Built once per grid step and shared by all pad-1 convs
    on the same spatial grid.
    """
    flat = lax.broadcasted_iota(jnp.int32, (1, hw), 1)
    col = flat % W
    shifts, masks = [], []
    for dy in (-1, 0, 1):
        for dx in (-1, 0, 1):
            s = dy * W + dx
            shifts.append(s)
            if (dy, dx) == (0, 0):
                masks.append(None)
                continue
            valid = (flat + s >= 0) & (flat + s < hw)          # source row exists
            if dx == 1:
                valid = valid & (col != W - 1)                 # right edge -> zero pad
            elif dx == -1:
                valid = valid & (col != 0)                     # left edge  -> zero pad
            masks.append(valid)
    return shifts, masks


def _im2col_matmul(x, w, b, shifts, masks, hw, roll_sign):
    """Generic 3x3 conv as ONE MXU matmul on a lane-flattened (Cin8, hw) activation.

    Builds the (9*Cin8, hw) im2col patch matrix with 9 lane rolls (+ optional
    boundary masks) and one concatenate, then a single K=9*Cin8 bf16 MXU matmul
    against the (Cout8, 9*Cin8) reshaped weight.  Bias fused in f32.
    """
    taps = []
    for s, m in zip(shifts, masks):
        t = _shift_flat(x, s, hw, roll_sign)
        if m is not None:
            t = jnp.where(m, t, 0.0)
        taps.append(t)
    patches = jnp.concatenate(taps, axis=0).astype(jnp.bfloat16)       # (9*Cin8, hw)
    return jnp.dot(w, patches, preferred_element_type=jnp.float32) + b  # (Cout8, hw)


def _conv1x1(x, w, b):
    """1x1 conv: (Cout8, Cin8) bf16 @ (Cin8, hw) -> f32, bias fused."""
    return jnp.dot(w, x.astype(jnp.bfloat16), preferred_element_type=jnp.float32) + b


def _leaky(y):
    return jnp.where(y >= 0, y, NEG_SLOPE * y)


# ----------------------------------------------------------------------------------
# Fused kernel: one grid step == one batch element, everything stays in VMEM.
# ----------------------------------------------------------------------------------
def _rlfb_fused_kernel(
    x_ref,
    w1_ref, b1_ref, w2_ref, b2_ref, w3_ref, b3_ref,
    w5_ref, b5_ref,
    we1_ref, be1_ref,
    we2_ref, be2_ref,
    pool_ref,
    we3_ref, be3_ref,
    up_ref,
    we4_ref, be4_ref,
    out_ref,
    *, H, W, Hp, Wp, C, roll_sign,
):
    HW = H * W
    NP = Hp * Wp
    x = x_ref[0].astype(jnp.float32)                                    # (C8, HW)

    # Boundary masks for the pad-1 convs on the full (H, W) grid: built once, shared.
    sh_p, mk_p = _pad1_shifts_masks(W, HW)

    # --- residual block: 3x (3x3 conv + LeakyReLU); residual add fused after the last.
    out = _leaky(_im2col_matmul(x, w1_ref[...], b1_ref[...], sh_p, mk_p, HW, roll_sign))
    out = _leaky(_im2col_matmul(out, w2_ref[...], b2_ref[...], sh_p, mk_p, HW, roll_sign))
    out = _leaky(_im2col_matmul(out, w3_ref[...], b3_ref[...], sh_p, mk_p, HW, roll_sign))
    out = out + x

    # --- c5 (1x1) and ESA conv1 (1x1)
    c5 = _conv1x1(out, w5_ref[...], b5_ref[...])                        # (C8, HW)
    c1_ = _conv1x1(c5, we1_ref[...], be1_ref[...])                      # (E8, HW)

    # --- ESA conv2 (3x3 / stride-2 / no-pad): computed as one full-grid valid-style
    #     3x3 conv (no masking needed: wrap-contaminated columns are never read),
    #     the stride-2 downsampling is folded into the maxpool masks below.
    sh_v = [ky * W + kx for ky in (0, 1, 2) for kx in (0, 1, 2)]
    c2full = _im2col_matmul(c1_, we2_ref[...], be2_ref[...],
                            sh_v, [None] * 9, HW, roll_sign)            # (E8, HW)

    # --- max_pool2d(kernel=7, stride=3) on the stride-2 grid: lane-masked max
    #     reductions reading only the stride-2-valid columns of c2full.
    pmask = pool_ref[...]                                               # (NP, HW) {0,1}
    cols = []
    for p in range(NP):
        m = pmask[p:p + 1, :] > 0.5
        cols.append(jnp.max(jnp.where(m, c2full, -jnp.inf), axis=1, keepdims=True))
    pooled = cols[0] if NP == 1 else jnp.concatenate(cols, axis=1)      # (E8, NP)

    # --- ESA conv3: 3x3 / pad-1 on the pooled (Hp, Wp) map.
    sh_pp, mk_pp = _pad1_shifts_masks(Wp, NP)
    c3 = _im2col_matmul(pooled, we3_ref[...], be3_ref[...],
                        sh_pp, mk_pp, NP, roll_sign)                    # (E8, NP)

    # --- bilinear upsample back to (H, W) via the precomputed (NP, HW) operator.
    up = up_ref[...]                                                    # (NP, HW) f32
    if NP == 1:
        c3u = c3 * up
    else:
        c3u = jnp.dot(c3.astype(jnp.bfloat16), up.astype(jnp.bfloat16),
                      preferred_element_type=jnp.float32)

    # --- conv4 (1x1) + sigmoid + gating, fused.  exp + approx reciprocal -> EUP slot.
    c4 = _conv1x1(c3u + c1_, we4_ref[...], be4_ref[...])                # (C8, HW)
    gate = pl.reciprocal(1.0 + jnp.exp(-c4), approx=True)
    y = c5 * gate

    out_ref[0] = y[:C].astype(out_ref.dtype)


# ----------------------------------------------------------------------------------
# Host-side (plain-JAX) operator construction + the public forward wrapper
# ----------------------------------------------------------------------------------
def _bilinear_matrix(out_size, in_size):
    """1-D linear-resize operator (out_size, in_size), align_corners=False (PyTorch)."""
    scale = in_size / out_size
    d = jnp.arange(out_size, dtype=jnp.float32)
    s = jnp.maximum((d + 0.5) * scale - 0.5, 0.0)
    i0 = jnp.clip(jnp.floor(s).astype(jnp.int32), 0, in_size - 1)
    i1 = jnp.clip(i0 + 1, 0, in_size - 1)
    lam = jnp.clip(s - i0.astype(jnp.float32), 0.0, 1.0)
    return (jax.nn.one_hot(i0, in_size, dtype=jnp.float32) * (1.0 - lam)[:, None]
            + jax.nn.one_hot(i1, in_size, dtype=jnp.float32) * lam[:, None])


def rlfb_prune_forward(x_nchw, params):
    """RLFB_Prune forward (NCHW in / NCHW out), fully fused in one pallas_call."""
    N, C, H, W = x_nchw.shape
    HW = H * W
    H2, W2 = (H - 3) // 2 + 1, (W - 3) // 2 + 1       # ESA conv2: 3x3, stride 2, pad 0
    Hp, Wp = (H2 - 7) // 3 + 1, (W2 - 7) // 3 + 1     # max_pool2d(kernel=7, stride=3)
    NP = Hp * Wp
    C8 = _rup8(C)
    E = params["esa_conv1_w"].shape[0]
    E8 = _rup8(E)
    P0, P1 = params["c1_r_w"].shape[-1], params["c2_r_w"].shape[-1]
    P08, P18 = _rup8(P0), _rup8(P1)

    roll_sign = _roll_matches_jnp()

    # Lane-dense activation layout: NCHW -> (N, C8, H*W); pure reshape, no transpose.
    x_flat = x_nchw.reshape(N, C, HW)
    if C8 != C:
        x_flat = jnp.pad(x_flat, ((0, 0), (0, C8 - C), (0, 0)))

    # ---- weights -> matmul-ready bf16; channel dims zero-padded to multiples of 8.
    def prep3x3(w, b):                     # w: (3, 3, Cin, Cout) HWIO
        ci, co = w.shape[2], w.shape[3]
        ci8, co8 = _rup8(ci), _rup8(co)
        wp = jnp.zeros((3, 3, ci8, co8), jnp.float32).at[:, :, :ci, :co].set(w)
        wr = wp.reshape(9 * ci8, co8).T.astype(jnp.bfloat16)           # (Cout8, 9*Cin8)
        bp = jnp.zeros((co8, 1), jnp.float32).at[:co, 0].set(b)
        return wr, bp

    def prep1x1(w, b):                     # w: (Cout, Cin)
        co, ci = w.shape
        ci8, co8 = _rup8(ci), _rup8(co)
        wp = jnp.zeros((co8, ci8), jnp.float32).at[:co, :ci].set(w).astype(jnp.bfloat16)
        bp = jnp.zeros((co8, 1), jnp.float32).at[:co, 0].set(b)
        return wp, bp

    w1, b1 = prep3x3(params["c1_r_w"], params["c1_r_b"])
    w2, b2 = prep3x3(params["c2_r_w"], params["c2_r_b"])
    w3, b3 = prep3x3(params["c3_r_w"], params["c3_r_b"])
    w5, b5 = prep1x1(params["c5_w"], params["c5_b"])
    we1, be1 = prep1x1(params["esa_conv1_w"], params["esa_conv1_b"])
    we2, be2 = prep3x3(params["esa_conv2_w"], params["esa_conv2_b"])
    we3, be3 = prep3x3(params["esa_conv3_w"], params["esa_conv3_b"])
    we4, be4 = prep1x1(params["esa_conv4_w"], params["esa_conv4_b"])

    # ---- precomputed spatial operators (tiny plain-JAX glue; consumed in-kernel) ----
    # (a) max_pool2d(7, 3) window masks over the FULL (H, W) grid.  Pooled pixel
    #     (pi, pj) reads stride-2 positions (2*(3*pi+u), 2*(3*pj+v)), u,v in [0,7):
    #     this fuses the conv2 stride-2 downsample into the pooling masks.
    masks = []
    for pi in range(Hp):
        for pj in range(Wp):
            m = jnp.zeros((H, W), bool)
            rr = 2 * (3 * pi + jnp.arange(7))
            cc = 2 * (3 * pj + jnp.arange(7))
            m = m.at[rr[:, None], cc[None, :]].set(True)
            masks.append(m.reshape(-1))
    pool_mask = jnp.stack(masks, axis=0).astype(jnp.float32)            # (NP, HW)

    # (b) bilinear upsample (align_corners=False) operator: (NP, HW).
    rh, rw = _bilinear_matrix(H, Hp), _bilinear_matrix(W, Wp)
    upmat = jnp.einsum("hp,wq->pqhw", rh, rw).reshape(NP, HW).astype(jnp.float32)

    kernel = functools.partial(_rlfb_fused_kernel, H=H, W=W, Hp=Hp, Wp=Wp, C=C,
                               roll_sign=roll_sign)

    def fixed(arr):
        return pl.BlockSpec(arr.shape, lambda n: (0,) * arr.ndim)

    args = [x_flat, w1, b1, w2, b2, w3, b3, w5, b5, we1, be1,
            we2, be2, pool_mask, we3, be3, upmat, we4, be4]
    in_specs = ([pl.BlockSpec((1, C8, HW), lambda n: (n, 0, 0))]
                + [fixed(a) for a in args[1:]])

    macs = ((P08 * 9 * C8 + P18 * 9 * P08 + C8 * 9 * P18
             + C8 * C8 + E8 * C8 + E8 * 9 * E8 + C8 * E8) * HW
            + E8 * 9 * E8 * NP + (E8 * NP * HW if NP > 1 else 0))
    param_bytes = sum(int(a.size) * a.dtype.itemsize for a in args[1:])
    cost = pl.CostEstimate(flops=int(2 * N * macs), transcendentals=int(N * C8 * HW),
                           bytes_accessed=int(8 * N * C * HW + param_bytes))

    # TODO(synk): for large SR resolutions (v7x: 64 MiB VMEM, v5e: 16 MiB scoped
    # default) switch the x/out specs to row-strip blocks with 1-row halos instead of
    # one full (C, H*W) image per grid step.
    out = pl.pallas_call(
        kernel,
        out_shape=jax.ShapeDtypeStruct((N, C, HW), x_nchw.dtype),
        grid=(N,),
        in_specs=in_specs,
        out_specs=pl.BlockSpec((1, C, HW), lambda n: (n, 0, 0)),
        compiler_params=pltpu.CompilerParams(dimension_semantics=("parallel",)),
        cost_estimate=cost,
    )(*args)
    return out.reshape(N, C, H, W)


# ----------------------------------------------------------------------------------
# Pure-JAX (XLA) reference with the exact semantics of the PyTorch module
# ----------------------------------------------------------------------------------
def rlfb_prune_reference(x_nchw, params):
    dn = ("NHWC", "HWIO", "NHWC")
    hi = lax.Precision.HIGHEST

    def conv(v, w, b, *, stride=1, pad=0):
        return lax.conv_general_dilated(
            v, w, (stride, stride), ((pad, pad), (pad, pad)),
            dimension_numbers=dn, precision=hi) + b

    def conv1x1(v, w, b):                 # w stored as (Cout, Cin)
        return conv(v, jnp.transpose(w)[None, None], b)

    def lrelu(v):
        return jnp.where(v >= 0, v, NEG_SLOPE * v)

    x = jnp.transpose(x_nchw, (0, 2, 3, 1))
    out = lrelu(conv(x, params["c1_r_w"], params["c1_r_b"], pad=1))
    out = lrelu(conv(out, params["c2_r_w"], params["c2_r_b"], pad=1))
    out = lrelu(conv(out, params["c3_r_w"], params["c3_r_b"], pad=1))
    out = out + x
    c5 = conv1x1(out, params["c5_w"], params["c5_b"])
    c1_ = conv1x1(c5, params["esa_conv1_w"], params["esa_conv1_b"])
    c1 = conv(c1_, params["esa_conv2_w"], params["esa_conv2_b"], stride=2)
    v_max = lax.reduce_window(c1, -jnp.inf, lax.max, (1, 7, 7, 1), (1, 3, 3, 1), "VALID")
    c3 = conv(v_max, params["esa_conv3_w"], params["esa_conv3_b"], pad=1)
    rh = _bilinear_matrix(x.shape[1], c3.shape[1])
    rw = _bilinear_matrix(x.shape[2], c3.shape[2])
    c3u = jnp.einsum("hp,wq,npqc->nhwc", rh, rw, c3, precision=hi)
    c4 = conv1x1(c3u + c1_, params["esa_conv4_w"], params["esa_conv4_b"])
    return jnp.transpose(c5 * jax.nn.sigmoid(c4), (0, 3, 1, 2))


# ----------------------------------------------------------------------------------
# Parameters
# ----------------------------------------------------------------------------------
def init_params(key, channels, prune_channels, esa_channels=16):
    """3x3 weights stored HWIO (3,3,Cin,Cout); 1x1 weights stored (Cout,Cin)."""
    def w3x3(k, cin, cout):
        return jax.random.normal(k, (3, 3, cin, cout), jnp.float32) / jnp.sqrt(9.0 * cin)

    def w1x1(k, cin, cout):
        return jax.random.normal(k, (cout, cin), jnp.float32) / jnp.sqrt(float(cin))

    def bias(k, cout):
        return 0.01 * jax.random.normal(k, (cout,), jnp.float32)

    ks = jax.random.split(key, 16)
    return {
        "c1_r_w": w3x3(ks[0], channels, prune_channels[0]),
        "c1_r_b": bias(ks[1], prune_channels[0]),
        "c2_r_w": w3x3(ks[2], prune_channels[0], prune_channels[1]),
        "c2_r_b": bias(ks[3], prune_channels[1]),
        "c3_r_w": w3x3(ks[4], prune_channels[1], channels),
        "c3_r_b": bias(ks[5], channels),
        "c5_w": w1x1(ks[6], channels, channels),
        "c5_b": bias(ks[7], channels),
        "esa_conv1_w": w1x1(ks[8], channels, esa_channels),
        "esa_conv1_b": bias(ks[9], esa_channels),
        "esa_conv2_w": w3x3(ks[10], esa_channels, esa_channels),
        "esa_conv2_b": bias(ks[11], esa_channels),
        "esa_conv3_w": w3x3(ks[12], esa_channels, esa_channels),
        "esa_conv3_b": bias(ks[13], esa_channels),
        "esa_conv4_w": w1x1(ks[14], esa_channels, esa_channels // 16 * 0 + channels),
        "esa_conv4_b": bias(ks[15], channels),
    }


# ----------------------------------------------------------------------------------
if __name__ == "__main__":
    key = jax.random.PRNGKey(0)
    k_params, k_x = jax.random.split(key)

    channels = 8
    prune_channels = (6, 5)
    N, H, W = 2, 16, 16

    params = init_params(k_params, channels, prune_channels)
    x = jax.random.normal(k_x, (N, channels, H, W), jnp.float32)

    out = jax.block_until_ready(rlfb_prune_forward(x, params))
    assert out.shape == (N, channels, H, W), out.shape
    assert bool(jnp.all(jnp.isfinite(out)))

    # Pure-JAX reference check (bf16 MXU operands vs f32 reference -> loose tolerance).
    ref = jax.block_until_ready(rlfb_prune_reference(x, params))
    max_err = float(jnp.max(jnp.abs(out - ref)))
    assert max_err < 0.15, f"kernel vs reference mismatch: max |diff| = {max_err}"

    print("KERNEL_OK")
</pallas_src>

<mosaic_0001>
module attributes {stable_mosaic.version = 11 : i64} {
  func.func @probe(%arg0: memref<8x128xf32, #tpu.memory_space<vmem>>, %arg1: memref<8x128xf32, #tpu.memory_space<vmem>>) attributes {dimension_semantics = [], scalar_prefetch = 0 : i64, scratch_operands = 0 : i64, tpu.core_type = #tpu.core_type<tc>} {
    %c0 = arith.constant 0 : index
    %c0_0 = arith.constant 0 : index
    %0 = vector.load %arg0[%c0, %c0_0] : memref<8x128xf32, #tpu.memory_space<vmem>>, vector<8x128xf32>
    %c3_i32 = arith.constant 3 : i32
    %1 = tpu.dynamic_rotate %0 by %c3_i32 dim 1 : vector<8x128xf32>, i32 -> vector<8x128xf32>
    %c0_1 = arith.constant 0 : index
    %c0_2 = arith.constant 0 : index
    %2 = vector.load %arg1[%c0_1, %c0_2] : memref<8x128xf32, #tpu.memory_space<vmem>>, vector<8x128xf32>
    tpu.vector_store %arg1[%c0_1, %c0_2], %1 {strides = array<i32>} : memref<8x128xf32, #tpu.memory_space<vmem>>, vector<8x128xf32>,
    return
  }
}

</mosaic_0001>

<llo_original>
// kernel: tpu_custom_call.1
$region0: #{tpu_custom_call.1}
  #allocation0 [shape = 'u32[]', space=smem, size = 0x4, offset = 0x4, fixed_abs, tag = 'smem constant byte address 0x4 - core index']
  #allocation1 [shape = 'u32[72,128]{1,0:T(1,128)}', space=vmem, size = 0x9000, scoped, tag = 'internal scratch']
  %s0 = inlined_call_operand.hbm [shape: f32[8,128], index: 0, kind: input, shape index: {}]
  %s1 = inlined_call_operand.hbm [shape: f32[8,128], index: 1, kind: output, shape index: {}]
  %s2 = sld [smem:[#allocation0]]
  $region18: #{tpu_custom_call.1} parent=0
    _
  %s4 = ssub.s32 1, %s2
  %s5 = scalar_select 0, %s4, %s2
  $region1: #{tpu_custom_call.1} parent=0
    #allocation2 [shape = 'u8[4096]{0}', space=vmem, size = 0x1000, scoped, tag = 'input window, operand 0, single buffered']
    #allocation3 [shape = 's32[1]{0}', space=sflag, size = 0x4, scoped, tag = 'scoped memory for tpu_custom_call.1']
    #allocation4 [shape = 's32[1]{0}', space=sflag, size = 0x4, scoped, tag = 'scoped memory for tpu_custom_call.1']
    #allocation5 [shape = 'u8[4096]{0}', space=vmem, size = 0x1000, scoped, tag = 'output window, operand 0, single buffered']
    %6 = vsyncpa [#allocation3], 0
    %7 = vsyncpa [#allocation4], 0
    // Predicated region
    $region2: #{tpu_custom_call.1} parent=1 // pred_check
      _
    $region3: #{tpu_custom_call.1} parent=1 // pred_check_branch
      %9 = sbr.rel (0) target = $region5
    $region4: #{tpu_custom_call.1} parent=1 // pred_region
      %11 = vsyncadd [#allocation3], 0
      %s13 = sshll.u32 %s0, 4
      %s14 = int_to_ptr.hbm [resolvable:$true] %s13
      %s15 = sshll.u32 [#allocation2], 4
      %s16 = int_to_ptr.vmem [resolvable:$true] %s15
      %18 = dma.hbm_to_vmem [thread:$0]  %s14, 128, %s16, [#allocation3]
    $region5: #{tpu_custom_call.1} parent=1 // pred_fallthru
      _
    // Predicated region
    $region6: #{tpu_custom_call.1} parent=1 // pred_check
      _
    $region7: #{tpu_custom_call.1} parent=1 // pred_check_branch
      %20 = sbr.rel (0) target = $region9
    $region8: #{tpu_custom_call.1} parent=1 // pred_region
      %22 = dma.done [#allocation3], 128
    $region9: #{tpu_custom_call.1} parent=1 // pred_fallthru
      _
    %v23 = vld [vmem:[#allocation2] sm:$0xff]
    %24 = vrot.lane.b32.xlu0 %v23, 3
    %v25 = vpop.permute.xlu0 %24
    %26 = vst [vmem:[#allocation5] sm:$0xff] %v25
    // Predicated region
    $region10: #{tpu_custom_call.1} parent=1 // pred_check
      _
    $region11: #{tpu_custom_call.1} parent=1 // pred_check_branch
      %28 = sbr.rel (0) target = $region13
    $region12: #{tpu_custom_call.1} parent=1 // pred_region
      %30 = vsyncadd [#allocation4], 0
      %s32 = sshll.u32 [#allocation5], 4
      %s33 = int_to_ptr.vmem [resolvable:$true] %s32
      %s34 = sshll.u32 %s1, 4
      %s35 = int_to_ptr.hbm [resolvable:$true] %s34
      %37 = dma.vmem_to_hbm [thread:$0]  %s33, 128, %s35, [#allocation4]
    $region13: #{tpu_custom_call.1} parent=1 // pred_fallthru
      _
    // Predicated region
    $region14: #{tpu_custom_call.1} parent=1 // pred_check
      _
    $region15: #{tpu_custom_call.1} parent=1 // pred_check_branch
      %39 = sbr.rel (0) target = $region17
    $region16: #{tpu_custom_call.1} parent=1 // pred_region
      %41 = dma.done [#allocation4], 128
    $region17: #{tpu_custom_call.1} parent=1 // pred_fallthru
      _
    %42 = vsyncpa [#allocation3], 1
    %43 = vsyncpa [#allocation4], 1

</llo_original>
